<compile_context>
chip_gen: v5e
topology: v5e:2x2
jax: 0.10.0
libtpu: 0.0.40
codegen_flags: <defaults>
</compile_context>

<pallas_src>
import functools
import math

import jax
import jax.numpy as jnp
from jax import lax
from jax.experimental import pallas as pl
from jax.experimental.pallas import tpu as pltpu


# ---------------------------------------------------------------------------
# Fused kernel: QKV projection + per-head attention + merged-head context +
# output projection, one grid step per batch element.
# ---------------------------------------------------------------------------
def _fused_attn_kernel(x_ref, wqkv_ref, bqkv_ref, wo_ref, bo_ref,
                       o_ref, *maybe_probs_ref, num_heads, head_dim, vis):
    H = num_heads * head_dim
    x = x_ref[0]                                                        # (S, H)

    # Merged QKV projection: one wide matmul, N = 3H.
    qkv = jnp.dot(x, wqkv_ref[...],
                  preferred_element_type=jnp.float32) + bqkv_ref[...]   # (S, 3H)

    scale = 1.0 / math.sqrt(head_dim)
    q = qkv[:, 0:H] * scale          # fold 1/sqrt(d) into q (cheaper than scaling scores)
    k = qkv[:, H:2 * H]
    v = qkv[:, 2 * H:3 * H]

    ctx_cols = []
    for h in range(num_heads):       # static unroll; num_heads is small
        sl = slice(h * head_dim, (h + 1) * head_dim)
        qh = q[:, sl]
        kh = k[:, sl]
        vh = v[:, sl]

        # scores = qh @ kh^T without materializing a transpose of kh.
        scores = lax.dot_general(qh, kh, (((1,), (1,)), ((), ())),
                                 preferred_element_type=jnp.float32)    # (S, S)

        # softmax(dim=-1), numerically stable (matches torch Softmax).
        scores = scores - jnp.max(scores, axis=-1, keepdims=True)
        e = jnp.exp(scores)
        probs = e * pl.reciprocal(jnp.sum(e, axis=-1, keepdims=True),
                                  approx=False)

        if vis:
            probs_ref = maybe_probs_ref[0]
            probs_ref[0, h] = probs.astype(probs_ref.dtype)

        ctx_cols.append(jnp.dot(probs, vh,
                                preferred_element_type=jnp.float32))    # (S, d)

    # Merged-head context in (S, H) layout -> lane-dense, then fused out proj.
    ctx = jnp.concatenate(ctx_cols, axis=-1)                            # (S, H)
    out = jnp.dot(ctx, wo_ref[...],
                  preferred_element_type=jnp.float32) + bo_ref[...]     # (S, H)
    o_ref[0] = out.astype(o_ref.dtype)


def attention_forward(hidden_states, params, num_heads, vis=True):
    """Pallas equivalent of Attention.forward.  Returns (attention_output, weights).

    params = (wqkv [H,3H], bqkv [1,3H], wo [H,H], bo [1,H]) with weights already in
    x @ W layout (the transpose of the torch Linear weight), Q/K/V concatenated
    along the output dimension.
    """
    wqkv, bqkv, wo, bo = params
    B, S, H = hidden_states.shape
    d = H // num_heads

    kernel = functools.partial(_fused_attn_kernel,
                               num_heads=num_heads, head_dim=d, vis=vis)

    in_specs = [
        pl.BlockSpec((1, S, H), lambda b: (b, 0, 0)),      # hidden_states (per batch)
        pl.BlockSpec((H, 3 * H), lambda b: (0, 0)),        # Wqkv (broadcast)
        pl.BlockSpec((1, 3 * H), lambda b: (0, 0)),        # bqkv
        pl.BlockSpec((H, H), lambda b: (0, 0)),            # Wo
        pl.BlockSpec((1, H), lambda b: (0, 0)),            # bo
    ]

    if vis:
        out_shape = (
            jax.ShapeDtypeStruct((B, S, H), hidden_states.dtype),
            jax.ShapeDtypeStruct((B, num_heads, S, S), hidden_states.dtype),
        )
        out_specs = (
            pl.BlockSpec((1, S, H), lambda b: (b, 0, 0)),
            pl.BlockSpec((1, num_heads, S, S), lambda b: (b, 0, 0, 0)),
        )
    else:
        out_shape = jax.ShapeDtypeStruct((B, S, H), hidden_states.dtype)
        out_specs = pl.BlockSpec((1, S, H), lambda b: (b, 0, 0))

    result = pl.pallas_call(
        kernel,
        out_shape=out_shape,
        grid=(B,),
        in_specs=in_specs,
        out_specs=out_specs,
        compiler_params=pltpu.CompilerParams(
            dimension_semantics=("parallel",)),
    )(hidden_states, wqkv, bqkv, wo, bo)

    if vis:
        out, probs = result
        return out, probs
    return result, None


# ---------------------------------------------------------------------------
# Pure-JAX reference (same math as the torch module) for a correctness check.
# ---------------------------------------------------------------------------
def attention_ref(x, params, num_heads):
    wqkv, bqkv, wo, bo = params
    B, S, H = x.shape
    d = H // num_heads
    wq, wk, wv = wqkv[:, 0:H], wqkv[:, H:2 * H], wqkv[:, 2 * H:3 * H]
    bq, bk, bv = bqkv[:, 0:H], bqkv[:, H:2 * H], bqkv[:, 2 * H:3 * H]

    def split(t):  # (B,S,H) -> (B,heads,S,d)
        return t.reshape(B, S, num_heads, d).transpose(0, 2, 1, 3)

    q = split(x @ wq + bq)
    k = split(x @ wk + bk)
    v = split(x @ wv + bv)
    scores = jnp.einsum("bhqd,bhkd->bhqk", q, k) / math.sqrt(d)
    probs = jax.nn.softmax(scores, axis=-1)
    ctx = jnp.einsum("bhqk,bhkd->bhqd", probs, v)
    ctx = ctx.transpose(0, 2, 1, 3).reshape(B, S, H)
    out = ctx @ wo + bo
    return out, probs


if __name__ == "__main__":
    # Small shapes consistent with the module: hidden_size=32, num_heads=4, seq=8, batch=2.
    B, S, H = 2, 8, 32
    num_heads = 4
    d = H // num_heads

    key = jax.random.PRNGKey(0)
    ks = jax.random.split(key, 5)
    x = jax.random.normal(ks[0], (B, S, H), dtype=jnp.float32)

    scale = 0.05
    wqkv = scale * jax.random.normal(ks[1], (H, 3 * H), dtype=jnp.float32)
    bqkv = scale * jax.random.normal(ks[2], (1, 3 * H), dtype=jnp.float32)
    wo = scale * jax.random.normal(ks[3], (H, H), dtype=jnp.float32)
    bo = scale * jax.random.normal(ks[4], (1, H), dtype=jnp.float32)
    params = (wqkv, bqkv, wo, bo)

    # vis=True path: attention output + attention probabilities.
    out, weights = attention_forward(x, params, num_heads, vis=True)
    out = jax.block_until_ready(out)
    weights = jax.block_until_ready(weights)

    out_ref, weights_ref = attention_ref(x, params, num_heads)
    assert out.shape == (B, S, H)
    assert weights.shape == (B, num_heads, S, S)
    assert jnp.allclose(out, out_ref, atol=1e-5, rtol=1e-5)
    assert jnp.allclose(weights, weights_ref, atol=1e-5, rtol=1e-5)

    # vis=False path: no probs output is produced or written at all.
    out_novis, weights_novis = attention_forward(x, params, num_heads, vis=False)
    out_novis = jax.block_until_ready(out_novis)
    assert weights_novis is None
    assert jnp.allclose(out_novis, out_ref, atol=1e-5, rtol=1e-5)

    print("KERNEL_OK")
</pallas_src>

<mosaic_0001>
module attributes {stable_mosaic.version = 11 : i64} {
  func.func @_fused_attn_kernel(%arg0: i32, %arg1: memref<1x8x32xf32, #tpu.memory_space<vmem>>, %arg2: memref<32x96xf32, #tpu.memory_space<vmem>>, %arg3: memref<1x96xf32, #tpu.memory_space<vmem>>, %arg4: memref<32x32xf32, #tpu.memory_space<vmem>>, %arg5: memref<1x32xf32, #tpu.memory_space<vmem>>, %arg6: memref<1x8x32xf32, #tpu.memory_space<vmem>>, %arg7: memref<1x4x8x8xf32, #tpu.memory_space<vmem>>) attributes {dimension_semantics = [#tpu.dimension_semantics<parallel>], iteration_bounds = array<i64: 2>, scalar_prefetch = 0 : i64, scratch_operands = 0 : i64, tpu.core_type = #tpu.core_type<tc>, window_params = [{transform_indices = @transform_0, window_bounds = array<i64: 1, 8, 32>}, {pipeline_mode = #tpu.pipeline_mode<synchronous>, transform_indices = @transform_1, window_bounds = array<i64: 32, 96>}, {pipeline_mode = #tpu.pipeline_mode<synchronous>, transform_indices = @transform_2, window_bounds = array<i64: 1, 96>}, {pipeline_mode = #tpu.pipeline_mode<synchronous>, transform_indices = @transform_3, window_bounds = array<i64: 32, 32>}, {pipeline_mode = #tpu.pipeline_mode<synchronous>, transform_indices = @transform_4, window_bounds = array<i64: 1, 32>}, {transform_indices = @transform_5, window_bounds = array<i64: 1, 8, 32>}, {transform_indices = @transform_6, window_bounds = array<i64: 1, 4, 8, 8>}]} {
    %c0 = arith.constant 0 : index
    %c0_0 = arith.constant 0 : index
    %c0_1 = arith.constant 0 : index
    %0 = vector.load %arg1[%c0, %c0_0, %c0_1] : memref<1x8x32xf32, #tpu.memory_space<vmem>>, vector<1x8x32xf32>
    %1 = vector.shape_cast %0 : vector<1x8x32xf32> to vector<8x32xf32>
    %c0_2 = arith.constant 0 : index
    %c0_3 = arith.constant 0 : index
    %2 = vector.load %arg2[%c0_2, %c0_3] : memref<32x96xf32, #tpu.memory_space<vmem>>, vector<32x96xf32>
    %cst = arith.constant dense<0.000000e+00> : vector<8x96xf32>
    %3 = tpu.matmul %1, %2, %cst {dimension_numbers = #tpu.dot_dimension_numbers<[1], [0], [0], [1], [0, 0, 1, 1], [], []>} : vector<8x32xf32>, vector<32x96xf32>, vector<8x96xf32> -> vector<8x96xf32>
    %c0_4 = arith.constant 0 : index
    %c0_5 = arith.constant 0 : index
    %4 = vector.load %arg3[%c0_4, %c0_5] : memref<1x96xf32, #tpu.memory_space<vmem>>, vector<1x96xf32>
    %5 = vector.broadcast %4 : vector<1x96xf32> to vector<8x96xf32>
    %6 = arith.addf %3, %5 : vector<8x96xf32>
    %7 = vector.extract_strided_slice %6 {offsets = [0, 0], sizes = [8, 32], strides = [1, 1]} : vector<8x96xf32> to vector<8x32xf32>
    %cst_6 = arith.constant 0.353553385 : f32
    %8 = vector.broadcast %cst_6 : f32 to vector<8x32xf32>
    %9 = arith.mulf %7, %8 : vector<8x32xf32>
    %10 = vector.extract_strided_slice %6 {offsets = [0, 32], sizes = [8, 32], strides = [1, 1]} : vector<8x96xf32> to vector<8x32xf32>
    %11 = vector.extract_strided_slice %6 {offsets = [0, 64], sizes = [8, 32], strides = [1, 1]} : vector<8x96xf32> to vector<8x32xf32>
    %12 = vector.extract_strided_slice %9 {offsets = [0, 0], sizes = [8, 8], strides = [1, 1]} : vector<8x32xf32> to vector<8x8xf32>
    %13 = vector.extract_strided_slice %10 {offsets = [0, 0], sizes = [8, 8], strides = [1, 1]} : vector<8x32xf32> to vector<8x8xf32>
    %14 = vector.extract_strided_slice %11 {offsets = [0, 0], sizes = [8, 8], strides = [1, 1]} : vector<8x32xf32> to vector<8x8xf32>
    %cst_7 = arith.constant dense<0.000000e+00> : vector<8x8xf32>
    %15 = tpu.matmul %12, %13, %cst_7 {dimension_numbers = #tpu.dot_dimension_numbers<[1], [1], [0], [0], [0, 0, 1, 0], [], []>} : vector<8x8xf32>, vector<8x8xf32>, vector<8x8xf32> -> vector<8x8xf32>
    %cst_8 = arith.constant dense<0xFF800000> : vector<8xf32>
    %16 = vector.multi_reduction <maximumf>, %15, %cst_8 [1] : vector<8x8xf32> to vector<8xf32>
    %17 = vector.shape_cast %16 : vector<8xf32> to vector<8x1xf32>
    %18 = vector.broadcast %17 : vector<8x1xf32> to vector<8x8xf32>
    %19 = arith.subf %15, %18 : vector<8x8xf32>
    %20 = math.exp %19 : vector<8x8xf32>
    %cst_9 = arith.constant dense<0.000000e+00> : vector<8xf32>
    %21 = vector.multi_reduction <add>, %20, %cst_9 [1] : vector<8x8xf32> to vector<8xf32>
    %22 = vector.shape_cast %21 : vector<8xf32> to vector<8x1xf32>
    %23 = tpu.reciprocal %22 : vector<8x1xf32> -> vector<8x1xf32>
    %24 = vector.broadcast %23 : vector<8x1xf32> to vector<8x8xf32>
    %25 = arith.mulf %20, %24 : vector<8x8xf32>
    %c0_10 = arith.constant 0 : index
    %c0_11 = arith.constant 0 : index
    %c0_12 = arith.constant 0 : index
    %c0_13 = arith.constant 0 : index
    %26 = vector.load %arg7[%c0_10, %c0_11, %c0_12, %c0_13] : memref<1x4x8x8xf32, #tpu.memory_space<vmem>>, vector<1x1x8x8xf32>
    %27 = vector.shape_cast %26 : vector<1x1x8x8xf32> to vector<8x8xf32>
    %28 = vector.shape_cast %25 : vector<8x8xf32> to vector<1x1x8x8xf32>
    tpu.vector_store %arg7[%c0_10, %c0_11, %c0_12, %c0_13], %28 {strides = array<i32>} : memref<1x4x8x8xf32, #tpu.memory_space<vmem>>, vector<1x1x8x8xf32>,
    %cst_14 = arith.constant dense<0.000000e+00> : vector<8x8xf32>
    %29 = tpu.matmul %25, %14, %cst_14 {dimension_numbers = #tpu.dot_dimension_numbers<[1], [0], [0], [1], [0, 0, 1, 1], [], []>} : vector<8x8xf32>, vector<8x8xf32>, vector<8x8xf32> -> vector<8x8xf32>
    %30 = vector.extract_strided_slice %9 {offsets = [0, 8], sizes = [8, 8], strides = [1, 1]} : vector<8x32xf32> to vector<8x8xf32>
    %31 = vector.extract_strided_slice %10 {offsets = [0, 8], sizes = [8, 8], strides = [1, 1]} : vector<8x32xf32> to vector<8x8xf32>
    %32 = vector.extract_strided_slice %11 {offsets = [0, 8], sizes = [8, 8], strides = [1, 1]} : vector<8x32xf32> to vector<8x8xf32>
    %cst_15 = arith.constant dense<0.000000e+00> : vector<8x8xf32>
    %33 = tpu.matmul %30, %31, %cst_15 {dimension_numbers = #tpu.dot_dimension_numbers<[1], [1], [0], [0], [0, 0, 1, 0], [], []>} : vector<8x8xf32>, vector<8x8xf32>, vector<8x8xf32> -> vector<8x8xf32>
    %cst_16 = arith.constant dense<0xFF800000> : vector<8xf32>
    %34 = vector.multi_reduction <maximumf>, %33, %cst_16 [1] : vector<8x8xf32> to vector<8xf32>
    %35 = vector.shape_cast %34 : vector<8xf32> to vector<8x1xf32>
    %36 = vector.broadcast %35 : vector<8x1xf32> to vector<8x8xf32>
    %37 = arith.subf %33, %36 : vector<8x8xf32>
    %38 = math.exp %37 : vector<8x8xf32>
    %cst_17 = arith.constant dense<0.000000e+00> : vector<8xf32>
    %39 = vector.multi_reduction <add>, %38, %cst_17 [1] : vector<8x8xf32> to vector<8xf32>
    %40 = vector.shape_cast %39 : vector<8xf32> to vector<8x1xf32>
    %41 = tpu.reciprocal %40 : vector<8x1xf32> -> vector<8x1xf32>
    %42 = vector.broadcast %41 : vector<8x1xf32> to vector<8x8xf32>
    %43 = arith.mulf %38, %42 : vector<8x8xf32>
    %c0_18 = arith.constant 0 : index
    %c1 = arith.constant 1 : index
    %c0_19 = arith.constant 0 : index
    %c0_20 = arith.constant 0 : index
    %44 = vector.load %arg7[%c0_18, %c1, %c0_19, %c0_20] : memref<1x4x8x8xf32, #tpu.memory_space<vmem>>, vector<1x1x8x8xf32>
    %45 = vector.shape_cast %44 : vector<1x1x8x8xf32> to vector<8x8xf32>
    %46 = vector.shape_cast %43 : vector<8x8xf32> to vector<1x1x8x8xf32>
    tpu.vector_store %arg7[%c0_18, %c1, %c0_19, %c0_20], %46 {strides = array<i32>} : memref<1x4x8x8xf32, #tpu.memory_space<vmem>>, vector<1x1x8x8xf32>,
    %cst_21 = arith.constant dense<0.000000e+00> : vector<8x8xf32>
    %47 = tpu.matmul %43, %32, %cst_21 {dimension_numbers = #tpu.dot_dimension_numbers<[1], [0], [0], [1], [0, 0, 1, 1], [], []>} : vector<8x8xf32>, vector<8x8xf32>, vector<8x8xf32> -> vector<8x8xf32>
    %48 = vector.extract_strided_slice %9 {offsets = [0, 16], sizes = [8, 8], strides = [1, 1]} : vector<8x32xf32> to vector<8x8xf32>
    %49 = vector.extract_strided_slice %10 {offsets = [0, 16], sizes = [8, 8], strides = [1, 1]} : vector<8x32xf32> to vector<8x8xf32>
    %50 = vector.extract_strided_slice %11 {offsets = [0, 16], sizes = [8, 8], strides = [1, 1]} : vector<8x32xf32> to vector<8x8xf32>
    %cst_22 = arith.constant dense<0.000000e+00> : vector<8x8xf32>
    %51 = tpu.matmul %48, %49, %cst_22 {dimension_numbers = #tpu.dot_dimension_numbers<[1], [1], [0], [0], [0, 0, 1, 0], [], []>} : vector<8x8xf32>, vector<8x8xf32>, vector<8x8xf32> -> vector<8x8xf32>
    %cst_23 = arith.constant dense<0xFF800000> : vector<8xf32>
    %52 = vector.multi_reduction <maximumf>, %51, %cst_23 [1] : vector<8x8xf32> to vector<8xf32>
    %53 = vector.shape_cast %52 : vector<8xf32> to vector<8x1xf32>
    %54 = vector.broadcast %53 : vector<8x1xf32> to vector<8x8xf32>
    %55 = arith.subf %51, %54 : vector<8x8xf32>
    %56 = math.exp %55 : vector<8x8xf32>
    %cst_24 = arith.constant dense<0.000000e+00> : vector<8xf32>
    %57 = vector.multi_reduction <add>, %56, %cst_24 [1] : vector<8x8xf32> to vector<8xf32>
    %58 = vector.shape_cast %57 : vector<8xf32> to vector<8x1xf32>
    %59 = tpu.reciprocal %58 : vector<8x1xf32> -> vector<8x1xf32>
    %60 = vector.broadcast %59 : vector<8x1xf32> to vector<8x8xf32>
    %61 = arith.mulf %56, %60 : vector<8x8xf32>
    %c0_25 = arith.constant 0 : index
    %c2 = arith.constant 2 : index
    %c0_26 = arith.constant 0 : index
    %c0_27 = arith.constant 0 : index
    %62 = vector.load %arg7[%c0_25, %c2, %c0_26, %c0_27] : memref<1x4x8x8xf32, #tpu.memory_space<vmem>>, vector<1x1x8x8xf32>
    %63 = vector.shape_cast %62 : vector<1x1x8x8xf32> to vector<8x8xf32>
    %64 = vector.shape_cast %61 : vector<8x8xf32> to vector<1x1x8x8xf32>
    tpu.vector_store %arg7[%c0_25, %c2, %c0_26, %c0_27], %64 {strides = array<i32>} : memref<1x4x8x8xf32, #tpu.memory_space<vmem>>, vector<1x1x8x8xf32>,
    %cst_28 = arith.constant dense<0.000000e+00> : vector<8x8xf32>
    %65 = tpu.matmul %61, %50, %cst_28 {dimension_numbers = #tpu.dot_dimension_numbers<[1], [0], [0], [1], [0, 0, 1, 1], [], []>} : vector<8x8xf32>, vector<8x8xf32>, vector<8x8xf32> -> vector<8x8xf32>
    %66 = vector.extract_strided_slice %9 {offsets = [0, 24], sizes = [8, 8], strides = [1, 1]} : vector<8x32xf32> to vector<8x8xf32>
    %67 = vector.extract_strided_slice %10 {offsets = [0, 24], sizes = [8, 8], strides = [1, 1]} : vector<8x32xf32> to vector<8x8xf32>
    %68 = vector.extract_strided_slice %11 {offsets = [0, 24], sizes = [8, 8], strides = [1, 1]} : vector<8x32xf32> to vector<8x8xf32>
    %cst_29 = arith.constant dense<0.000000e+00> : vector<8x8xf32>
    %69 = tpu.matmul %66, %67, %cst_29 {dimension_numbers = #tpu.dot_dimension_numbers<[1], [1], [0], [0], [0, 0, 1, 0], [], []>} : vector<8x8xf32>, vector<8x8xf32>, vector<8x8xf32> -> vector<8x8xf32>
    %cst_30 = arith.constant dense<0xFF800000> : vector<8xf32>
    %70 = vector.multi_reduction <maximumf>, %69, %cst_30 [1] : vector<8x8xf32> to vector<8xf32>
    %71 = vector.shape_cast %70 : vector<8xf32> to vector<8x1xf32>
    %72 = vector.broadcast %71 : vector<8x1xf32> to vector<8x8xf32>
    %73 = arith.subf %69, %72 : vector<8x8xf32>
    %74 = math.exp %73 : vector<8x8xf32>
    %cst_31 = arith.constant dense<0.000000e+00> : vector<8xf32>
    %75 = vector.multi_reduction <add>, %74, %cst_31 [1] : vector<8x8xf32> to vector<8xf32>
    %76 = vector.shape_cast %75 : vector<8xf32> to vector<8x1xf32>
    %77 = tpu.reciprocal %76 : vector<8x1xf32> -> vector<8x1xf32>
    %78 = vector.broadcast %77 : vector<8x1xf32> to vector<8x8xf32>
    %79 = arith.mulf %74, %78 : vector<8x8xf32>
    %c0_32 = arith.constant 0 : index
    %c3 = arith.constant 3 : index
    %c0_33 = arith.constant 0 : index
    %c0_34 = arith.constant 0 : index
    %80 = vector.load %arg7[%c0_32, %c3, %c0_33, %c0_34] : memref<1x4x8x8xf32, #tpu.memory_space<vmem>>, vector<1x1x8x8xf32>
    %81 = vector.shape_cast %80 : vector<1x1x8x8xf32> to vector<8x8xf32>
    %82 = vector.shape_cast %79 : vector<8x8xf32> to vector<1x1x8x8xf32>
    tpu.vector_store %arg7[%c0_32, %c3, %c0_33, %c0_34], %82 {strides = array<i32>} : memref<1x4x8x8xf32, #tpu.memory_space<vmem>>, vector<1x1x8x8xf32>,
    %cst_35 = arith.constant dense<0.000000e+00> : vector<8x8xf32>
    %83 = tpu.matmul %79, %68, %cst_35 {dimension_numbers = #tpu.dot_dimension_numbers<[1], [0], [0], [1], [0, 0, 1, 1], [], []>} : vector<8x8xf32>, vector<8x8xf32>, vector<8x8xf32> -> vector<8x8xf32>
    %84 = tpu.concatenate %29, %47, %65, %83 in 1 : vector<8x8xf32>, vector<8x8xf32>, vector<8x8xf32>, vector<8x8xf32> -> vector<8x32xf32>
    %c0_36 = arith.constant 0 : index
    %c0_37 = arith.constant 0 : index
    %85 = vector.load %arg4[%c0_36, %c0_37] : memref<32x32xf32, #tpu.memory_space<vmem>>, vector<32x32xf32>
    %cst_38 = arith.constant dense<0.000000e+00> : vector<8x32xf32>
    %86 = tpu.matmul %84, %85, %cst_38 {dimension_numbers = #tpu.dot_dimension_numbers<[1], [0], [0], [1], [0, 0, 1, 1], [], []>} : vector<8x32xf32>, vector<32x32xf32>, vector<8x32xf32> -> vector<8x32xf32>
    %c0_39 = arith.constant 0 : index
    %c0_40 = arith.constant 0 : index
    %87 = vector.load %arg5[%c0_39, %c0_40] : memref<1x32xf32, #tpu.memory_space<vmem>>, vector<1x32xf32>
    %88 = vector.broadcast %87 : vector<1x32xf32> to vector<8x32xf32>
    %89 = arith.addf %86, %88 : vector<8x32xf32>
    %c0_41 = arith.constant 0 : index
    %c0_42 = arith.constant 0 : index
    %c0_43 = arith.constant 0 : index
    %90 = vector.load %arg6[%c0_41, %c0_42, %c0_43] : memref<1x8x32xf32, #tpu.memory_space<vmem>>, vector<1x8x32xf32>
    %91 = vector.shape_cast %90 : vector<1x8x32xf32> to vector<8x32xf32>
    %92 = vector.shape_cast %89 : vector<8x32xf32> to vector<1x8x32xf32>
    tpu.vector_store %arg6[%c0_41, %c0_42, %c0_43], %92 {strides = array<i32>} : memref<1x8x32xf32, #tpu.memory_space<vmem>>, vector<1x8x32xf32>,
    return
  }
  func.func @transform_0(%arg0: i32) -> (i32, i32, i32) {
    %c0_i32 = arith.constant 0 : i32
    %c0_i32_0 = arith.constant 0 : i32
    %c0_i32_1 = arith.constant 0 : i32
    return %arg0, %c0_i32, %c0_i32_0 : i32, i32, i32
  }
  func.func @transform_1(%arg0: i32) -> (i32, i32) {
    %c0_i32 = arith.constant 0 : i32
    %c0_i32_0 = arith.constant 0 : i32
    %c0_i32_1 = arith.constant 0 : i32
    return %c0_i32, %c0_i32_0 : i32, i32
  }
  func.func @transform_2(%arg0: i32) -> (i32, i32) {
    %c0_i32 = arith.constant 0 : i32
    %c0_i32_0 = arith.constant 0 : i32
    %c0_i32_1 = arith.constant 0 : i32
    return %c0_i32, %c0_i32_0 : i32, i32
  }
  func.func @transform_3(%arg0: i32) -> (i32, i32) {
    %c0_i32 = arith.constant 0 : i32
    %c0_i32_0 = arith.constant 0 : i32
    %c0_i32_1 = arith.constant 0 : i32
    return %c0_i32, %c0_i32_0 : i32, i32
  }
  func.func @transform_4(%arg0: i32) -> (i32, i32) {
    %c0_i32 = arith.constant 0 : i32
    %c0_i32_0 = arith.constant 0 : i32
    %c0_i32_1 = arith.constant 0 : i32
    return %c0_i32, %c0_i32_0 : i32, i32
  }
  func.func @transform_5(%arg0: i32) -> (i32, i32, i32) {
    %c0_i32 = arith.constant 0 : i32
    %c0_i32_0 = arith.constant 0 : i32
    %c0_i32_1 = arith.constant 0 : i32
    return %arg0, %c0_i32, %c0_i32_0 : i32, i32, i32
  }
  func.func @transform_6(%arg0: i32) -> (i32, i32, i32, i32) {
    %c0_i32 = arith.constant 0 : i32
    %c0_i32_0 = arith.constant 0 : i32
    %c0_i32_1 = arith.constant 0 : i32
    %c0_i32_2 = arith.constant 0 : i32
    return %arg0, %c0_i32, %c0_i32_0, %c0_i32_1 : i32, i32, i32, i32
  }
}

</mosaic_0001>

<llo_original>
// kernel: tpu_custom_call.1
$region0: #{tpu_custom_call.1}
  #allocation0 [shape = 'u32[]', space=smem, size = 0x4, offset = 0x4, fixed_abs, tag = 'smem constant byte address 0x4 - core index']
  #allocation1 [shape = 'u32[72,128]{1,0:T(1,128)}', space=vmem, size = 0x9000, scoped, tag = 'internal scratch']
  %s0 = inlined_call_operand.hbm [shape: f32[2,8,32], index: 0, kind: input, shape index: {}]
  %s1 = inlined_call_operand.hbm [shape: f32[32,96], index: 1, kind: input, shape index: {}]
  %s2 = inlined_call_operand.vmem [shape: f32[1,96], index: 2, kind: input, shape index: {}]
  %s3 = inlined_call_operand.hbm [shape: f32[32,32], index: 3, kind: input, shape index: {}]
  %s4 = inlined_call_operand.vmem [shape: f32[1,32], index: 4, kind: input, shape index: {}]
  %s5 = inlined_call_operand.hbm [shape: f32[2,8,32], index: 5, kind: output, shape index: {0}]
  %s6 = inlined_call_operand.hbm [shape: f32[2,4,8,8], index: 6, kind: output, shape index: {1}]
  %7 = xla_tuple %s5, %s6
  %s8 = sld [smem:[#allocation0]]
  $region73: #{tpu_custom_call.1} parent=0
    _
  %s10 = ssub.s32 1, %s8
  %s11 = scalar_select 0, %s10, %s8
  $region1: #{tpu_custom_call.1} parent=0
    #allocation2 [shape = 'u8[8192]{0}', space=vmem, size = 0x2000, scoped, tag = 'input window, operand 0']
    #allocation3 [shape = 's32[2]{0}', space=sflag, size = 0x8, scoped, tag = 'scoped memory for tpu_custom_call.1']
    #allocation4 [shape = 's32[2]{0}', space=sflag, size = 0x8, scoped, tag = 'scoped memory for tpu_custom_call.1']
    #allocation5 [shape = 'u8[16384]{0}', space=vmem, size = 0x4000, scoped, tag = 'input window, operand 1, single buffered']
    #allocation6 [shape = 's32[1]{0}', space=sflag, size = 0x4, scoped, tag = 'scoped memory for tpu_custom_call.1']
    #allocation7 [shape = 'u8[16384]{0}', space=vmem, size = 0x4000, scoped, tag = 'input window, operand 3, single buffered']
    #allocation8 [shape = 'u8[8192]{0}', space=vmem, size = 0x2000, scoped, tag = 'output window, operand 0']
    #allocation9 [shape = 'u8[32768]{0}', space=vmem, size = 0x8000, scoped, tag = 'output window, operand 1']
    #allocation10 [shape = 's32[2]{0}', space=sflag, size = 0x8, scoped, tag = 'scoped memory for tpu_custom_call.1']
    %12 = vsyncpa [#allocation3], 0
    %s13 = scalar_lea.sflag [#allocation3], 1
    %14 = vsyncpa %s13, 0
    %15 = vsyncpa [#allocation6], 0
    %16 = vsyncpa [#allocation4], 0
    %s17 = scalar_lea.sflag [#allocation4], 1
    %18 = vsyncpa %s17, 0
    %19 = vsyncpa [#allocation10], 0
    %s20 = scalar_lea.sflag [#allocation10], 1
    %21 = vsyncpa %s20, 0
    loop: start=0, step=1, limit=4
    $region2: #{tpu_custom_call.1} parent=1 // loop_pre_header
      _
    $region3: #{tpu_custom_call.1} parent=1 // loop_header
      %s23 = sphi 0, %s27
      %p24 = scmp.ge.s32.totalorder %s23, 4
      %s33 = sphi 0, %s35
      %s36 = sphi 0, %s33
      %s37 = sphi 0, %s36
      %s53 = sphi 0, %s37
      %s57 = sphi 0, %s57
      %s59 = sphi 0, %s57
      %s60 = sphi 0, %s59
      %s74 = sphi 0, %s60
      %s78 = sphi 0, %s78
      %s80 = sphi 0, %s78
      %s81 = sphi 0, %s80
      %s95 = sphi 0, %s81
      %s99 = sphi 0, %s99
      %s101 = sphi 0, %s99
      %s102 = sphi 0, %s101
      %s116 = sphi 0, %s102
      %s120 = sphi 0, %s120
      %s122 = sphi 0, %s120
      %s123 = sphi 0, %s122
      %s137 = sphi 0, %s123
      %s143 = sphi 0, %s145
      %s146 = sphi 0, %s143
      %s147 = sphi 0, %s146
      %s163 = sphi 0, %s147
      %s169 = sphi 0, %s171
      %s172 = sphi 0, %s169
      %s173 = sphi 0, %s172
      %s189 = sphi 0, %s173
    $region4: #{tpu_custom_call.1} parent=1 // loop_header_branch
      %26 = sbr.rel (%p24) target = $region8
    $region5: #{tpu_custom_call.1} parent=1 // loop_body
      %s28 = ssub.s32 %s23, 1
      %s29 = ssub.s32 %s23, 2
      %s30 = sadd.s32 %s23, 1
      %s31 = ssub.s32 %s23, %s30
      %p32 = scmp.eq.s32.totalorder %s31, 0
      %s34 = sadd.s32 %s33, 1
      %s35 = scalar_select %p32, %s33, %s34
      %p38 = pneg %p32
      %p39 = scmp.eq.s32.totalorder %s23, 1
      %p40 = por %p38, %p39
      %p41 = scmp.ne.s32.totalorder %s33, %s36
      %p42 = scmp.eq.s32.totalorder %s23, 0
      %p43 = por %p41, %p42
      %p44 = scmp.ne.s32.totalorder %s33, %s36
      %p45 = scmp.eq.s32.totalorder %s28, 1
      %p46 = por %p44, %p45
      %p47 = scmp.ne.s32.totalorder %s36, %s37
      %p48 = scmp.eq.s32.totalorder %s28, 0
      %p49 = por %p47, %p48
      %p50 = scmp.ne.s32.totalorder %s36, %s37
      %p51 = scmp.eq.s32.totalorder %s29, 1
      %p52 = por %p50, %p51
      %p54 = scmp.ne.s32.totalorder %s37, %s53
      %p55 = scmp.eq.s32.totalorder %s29, 0
      %p56 = por %p54, %p55
      %s58 = sadd.s32 %s57, 1
      %p61 = scmp.eq.s32.totalorder %s23, 1
      %p62 = scmp.ne.s32.totalorder %s57, %s59
      %p63 = scmp.eq.s32.totalorder %s23, 0
      %p64 = por %p62, %p63
      %p65 = scmp.ne.s32.totalorder %s57, %s59
      %p66 = scmp.eq.s32.totalorder %s28, 1
      %p67 = por %p65, %p66
      %p68 = scmp.ne.s32.totalorder %s59, %s60
      %p69 = scmp.eq.s32.totalorder %s28, 0
      %p70 = por %p68, %p69
      %p71 = scmp.ne.s32.totalorder %s59, %s60
      %p72 = scmp.eq.s32.totalorder %s29, 1
      %p73 = por %p71, %p72
      %p75 = scmp.ne.s32.totalorder %s60, %s74
      %p76 = scmp.eq.s32.totalorder %s29, 0
      %p77 = por %p75, %p76
      %s79 = sadd.s32 %s78, 1
      %p82 = scmp.eq.s32.totalorder %s23, 1
      %p83 = scmp.ne.s32.totalorder %s78, %s80
      %p84 = scmp.eq.s32.totalorder %s23, 0
      %p85 = por %p83, %p84
      %p86 = scmp.ne.s32.totalorder %s78, %s80
      %p87 = scmp.eq.s32.totalorder %s28, 1
      %p88 = por %p86, %p87
      %p89 = scmp.ne.s32.totalorder %s80, %s81
      %p90 = scmp.eq.s32.totalorder %s28, 0
      %p91 = por %p89, %p90
      %p92 = scmp.ne.s32.totalorder %s80, %s81
      %p93 = scmp.eq.s32.totalorder %s29, 1
      %p94 = por %p92, %p93
      %p96 = scmp.ne.s32.totalorder %s81, %s95
      %p97 = scmp.eq.s32.totalorder %s29, 0
      %p98 = por %p96, %p97
      %s100 = sadd.s32 %s99, 1
      %p103 = scmp.eq.s32.totalorder %s23, 1
      %p104 = scmp.ne.s32.totalorder %s99, %s101
      %p105 = scmp.eq.s32.totalorder %s23, 0
      %p106 = por %p104, %p105
      %p107 = scmp.ne.s32.totalorder %s99, %s101
      %p108 = scmp.eq.s32.totalorder %s28, 1
      %p109 = por %p107, %p108
      %p110 = scmp.ne.s32.totalorder %s101, %s102
      %p111 = scmp.eq.s32.totalorder %s28, 0
      %p112 = por %p110, %p111
      %p113 = scmp.ne.s32.totalorder %s101, %s102
      %p114 = scmp.eq.s32.totalorder %s29, 1
      %p115 = por %p113, %p114
      %p117 = scmp.ne.s32.totalorder %s102, %s116
      %p118 = scmp.eq.s32.totalorder %s29, 0
      %p119 = por %p117, %p118
      %s121 = sadd.s32 %s120, 1
      %p124 = scmp.eq.s32.totalorder %s23, 1
      %p125 = scmp.ne.s32.totalorder %s120, %s122
      %p126 = scmp.eq.s32.totalorder %s23, 0
      %p127 = por %p125, %p126
      %p128 = scmp.ne.s32.totalorder %s120, %s122
      %p129 = scmp.eq.s32.totalorder %s28, 1
      %p130 = por %p128, %p129
      %p131 = scmp.ne.s32.totalorder %s122, %s123
      %p132 = scmp.eq.s32.totalorder %s28, 0
      %p133 = por %p131, %p132
      %p134 = scmp.ne.s32.totalorder %s122, %s123
      %p135 = scmp.eq.s32.totalorder %s29, 1
      %p136 = por %p134, %p135
      %p138 = scmp.ne.s32.totalorder %s123, %s137
      %p139 = scmp.eq.s32.totalorder %s29, 0
      %p140 = por %p138, %p139
      %s141 = ssub.s32 %s23, %s30
      %p142 = scmp.eq.s32.totalorder %s141, 0
      %s144 = sadd.s32 %s143, 1
      %s145 = scalar_select %p142, %s143, %s144
      %p148 = pneg %p142
      %p149 = scmp.eq.s32.totalorder %s23, 1
      %p150 = por %p148, %p149
      %p151 = scmp.ne.s32.totalorder %s143, %s146
      %p152 = scmp.eq.s32.totalorder %s23, 0
      %p153 = por %p151, %p152
      %p154 = scmp.ne.s32.totalorder %s143, %s146
      %p155 = scmp.eq.s32.totalorder %s28, 1
      %p156 = por %p154, %p155
      %p157 = scmp.ne.s32.totalorder %s146, %s147
      %p158 = scmp.eq.s32.totalorder %s28, 0
      %p159 = por %p157, %p158
      %p160 = scmp.ne.s32.totalorder %s146, %s147
      %p161 = scmp.eq.s32.totalorder %s29, 1
      %p162 = por %p160, %p161
      %p164 = scmp.ne.s32.totalorder %s147, %s163
      %p165 = scmp.eq.s32.totalorder %s29, 0
      %p166 = por %p164, %p165
      %s167 = ssub.s32 %s23, %s30
      %p168 = scmp.eq.s32.totalorder %s167, 0
      %s170 = sadd.s32 %s169, 1
      %s171 = scalar_select %p168, %s169, %s170
      %p174 = pneg %p168
      %p175 = scmp.eq.s32.totalorder %s23, 1
      %p176 = por %p174, %p175
      %p177 = scmp.ne.s32.totalorder %s169, %s172
      %p178 = scmp.eq.s32.totalorder %s23, 0
      %p179 = por %p177, %p178
      %p180 = scmp.ne.s32.totalorder %s169, %s172
      %p181 = scmp.eq.s32.totalorder %s28, 1
      %p182 = por %p180, %p181
      %p183 = scmp.ne.s32.totalorder %s172, %s173
      %p184 = scmp.eq.s32.totalorder %s28, 0
      %p185 = por %p183, %p184
      %p186 = scmp.ne.s32.totalorder %s172, %s173
      %p187 = scmp.eq.s32.totalorder %s29, 1
      %p188 = por %p186, %p187
      %p190 = scmp.ne.s32.totalorder %s173, %s189
      %p191 = scmp.eq.s32.totalorder %s29, 0
      %p192 = por %p190, %p191
      %p193 = scmp.le.s32.totalorder 1, %s23
      %p194 = scmp.lt.s32.totalorder %s23, 3
      %p195 = pnand %p193, %p194
      %p196 = pneg %p195
      // Predicated region
      $region9: #{tpu_custom_call.1} parent=5 // pred_check
        _
      $region10: #{tpu_custom_call.1} parent=5 // pred_check_branch
        %198 = sbr.rel (%p195) target = $region12
      $region11: #{tpu_custom_call.1} parent=5 // pred_region
        %s199 = ssub.s32 %s23, 1
        // Predicated region
        $region13: #{tpu_custom_call.1} parent=11 // pred_check
          %p200 = pneg %p70
        $region14: #{tpu_custom_call.1} parent=11 // pred_check_branch
          %202 = sbr.rel (%p200) target = $region16
        $region15: #{tpu_custom_call.1} parent=11 // pred_region
          %204 = vsyncadd [#allocation6], 0
          %s205 = sshll.u32 %s1, 4
          %s206 = int_to_ptr.hbm [resolvable:$true] %s205
          %s207 = sshll.u32 [#allocation5], 4
          %s208 = int_to_ptr.vmem [resolvable:$true] %s207
          %213 = dma.hbm_to_vmem [thread:$0]  %s206, 512, %s208, [#allocation6], 128, 128, 8
        $region16: #{tpu_custom_call.1} parent=11 // pred_fallthru
          _
        // Predicated region
        $region17: #{tpu_custom_call.1} parent=11 // pred_check
          %p214 = pneg %p91
        $region18: #{tpu_custom_call.1} parent=11 // pred_check_branch
          %216 = sbr.rel (%p214) target = $region20
        $region19: #{tpu_custom_call.1} parent=11 // pred_region
          _
        $region20: #{tpu_custom_call.1} parent=11 // pred_fallthru
          _
        // Predicated region
        $region21: #{tpu_custom_call.1} parent=11 // pred_check
          %p217 = pneg %p112
        $region22: #{tpu_custom_call.1} parent=11 // pred_check_branch
          %219 = sbr.rel (%p217) target = $region24
        $region23: #{tpu_custom_call.1} parent=11 // pred_region
          %221 = vsyncadd [#allocation6], 0
          %s222 = sshll.u32 %s3, 4
          %s223 = int_to_ptr.hbm [resolvable:$true] %s222
          %s224 = sshll.u32 [#allocation7], 4
          %s225 = int_to_ptr.vmem [resolvable:$true] %s224
          %230 = dma.hbm_to_vmem [thread:$0]  %s223, 512, %s225, [#allocation6], 128, 128, 8
        $region24: #{tpu_custom_call.1} parent=11 // pred_fallthru
          _
        // Predicated region
        $region25: #{tpu_custom_call.1} parent=11 // pred_check
          %p231 = pneg %p133
        $region26: #{tpu_custom_call.1} parent=11 // pred_check_branch
          %233 = sbr.rel (%p231) target = $region28
        $region27: #{tpu_custom_call.1} parent=11 // pred_region
          _
        $region28: #{tpu_custom_call.1} parent=11 // pred_fallthru
          _
      $region12: #{tpu_custom_call.1} parent=5 // pred_fallthru
        _
      %p234 = scmp.lt.s32.totalorder %s23, 2
      // Predicated region
      $region29: #{tpu_custom_call.1} parent=5 // pred_check
        %p235 = pneg %p234
      $region30: #{tpu_custom_call.1} parent=5 // pred_check_branch
        %237 = sbr.rel (%p235) target = $region32
      $region31: #{tpu_custom_call.1} parent=5 // pred_region
        // Predicated region
        $region33: #{tpu_custom_call.1} parent=31 // pred_check
          %p238 = pneg %p43
        $region34: #{tpu_custom_call.1} parent=31 // pred_check_branch
          %240 = sbr.rel (%p238) target = $region36
        $region35: #{tpu_custom_call.1} parent=31 // pred_region
          %s241 = sand.u32 %s33, 1
          %s242 = scalar_lea.sflag [#allocation3], %s241
          %s243 = sand.u32 %s33, 1
          %s244 = smul.addr %s243, 8
          %s245 = scalar_lea.vmem [#allocation2], %s244
          %247 = vsyncadd %s242, 0
          %s248 = smul.addr %s23, 8
          %s249 = scalar_lea.hbm %s0, %s248
          %s251 = sshll.u32 %s249, 4
          %s252 = int_to_ptr.hbm [resolvable:$true] %s251
          %s253 = sshll.u32 %s245, 4
          %s254 = int_to_ptr.vmem [resolvable:$true] %s253
          %256 = dma.hbm_to_vmem [thread:$0]  %s252, 128, %s254, %s242
        $region36: #{tpu_custom_call.1} parent=31 // pred_fallthru
          _
      $region32: #{tpu_custom_call.1} parent=5 // pred_fallthru
        _
      %p257 = scmp.le.s32.totalorder 1, %s23
      %p258 = scmp.lt.s32.totalorder %s23, 3
      %p259 = pnand %p257, %p258
      %p260 = pneg %p259
      // Predicated region
      $region37: #{tpu_custom_call.1} parent=5 // pred_check
        _
      $region38: #{tpu_custom_call.1} parent=5 // pred_check_branch
        %262 = sbr.rel (%p259) target = $region40
      $region39: #{tpu_custom_call.1} parent=5 // pred_region
        %s263 = ssub.s32 %s23, 1
        %s264 = sand.u32 %s36, 1
        %s265 = scalar_lea.sflag [#allocation3], %s264
        %s266 = sand.u32 %s36, 1
        %s267 = smul.addr %s266, 8
        %s268 = scalar_lea.vmem [#allocation2], %s267
        // Predicated region
        $region41: #{tpu_custom_call.1} parent=39 // pred_check
          %p269 = pneg %p49
        $region42: #{tpu_custom_call.1} parent=39 // pred_check_branch
          %271 = sbr.rel (%p269) target = $region44
        $region43: #{tpu_custom_call.1} parent=39 // pred_region
          %273 = dma.done %s265, 128
        $region44: #{tpu_custom_call.1} parent=39 // pred_fallthru
          _
        // Predicated region
        $region45: #{tpu_custom_call.1} parent=39 // pred_check
          %p274 = pneg %p70
        $region46: #{tpu_custom_call.1} parent=39 // pred_check_branch
          %276 = sbr.rel (%p274) target = $region48
        $region47: #{tpu_custom_call.1} parent=39 // pred_region
          %278 = dma.done [#allocation6], 512
        $region48: #{tpu_custom_call.1} parent=39 // pred_fallthru
          _
        // Predicated region
        $region49: #{tpu_custom_call.1} parent=39 // pred_check
          %p279 = pneg %p112
        $region50: #{tpu_custom_call.1} parent=39 // pred_check_branch
          %281 = sbr.rel (%p279) target = $region52
        $region51: #{tpu_custom_call.1} parent=39 // pred_region
          %283 = dma.done [#allocation6], 512
        $region52: #{tpu_custom_call.1} parent=39 // pred_fallthru
          _
        %s284 = sand.u32 %s36, 1
        %s285 = scalar_lea.sflag [#allocation3], %s284
        %s286 = sand.u32 %s36, 1
        %s287 = smul.addr %s286, 8
        %s288 = scalar_lea.vmem [#allocation2], %s287
        %p289 = pneg %p49
        %p290 = pneg %p46
        %p291 = pneg %p70
        %p292 = pneg %p67
        %p293 = pneg %p91
        %p294 = pneg %p88
        %p295 = pneg %p112
        %p296 = pneg %p109
        %p297 = pneg %p133
        %p298 = pneg %p130
        %p299 = pneg %p159
        %p300 = pneg %p156
        %s301 = sand.u32 %s146, 1
        %s302 = scalar_lea.sflag [#allocation4], %s301
        %s303 = sand.u32 %s146, 1
        %s304 = smul.addr %s303, 8
        %s305 = scalar_lea.vmem [#allocation8], %s304
        %p306 = pneg %p185
        %p307 = pneg %p182
        %s308 = sand.u32 %s172, 1
        %s309 = scalar_lea.sflag [#allocation10], %s308
        %s310 = sand.u32 %s172, 1
        %s311 = smul.addr %s310, 32
        %s312 = scalar_lea.vmem [#allocation9], %s311
        %v313 = vld [vmem:[%s268] sm:$0xff]
        %v314 = vld [vmem:[#allocation5] sm:$0xff]
        %v315 = vld [vmem:[#allocation5 + $0x8] sm:$0xff]
        %v316 = vld [vmem:[#allocation5 + $0x10] sm:$0xff]
        %v317 = vld [vmem:[#allocation5 + $0x18] sm:$0xff]
        %v318 = vld [vmem:[%s2] sm:$0x1]
        %v320 = vperm.slane %v318, 0
        %vm322 = vcmask 261120
        %v324 = vsel %vm322, %v313, 0
        %326 = vmatpush.msra.mxu0 0.0
        %327 = vmatpush.msra.mxu0 0.0
        %328 = vmatpush.msra.mxu0 0.0
        %329 = vmatpush.msra.mxu0 0.0
        %330 = vmatpush.msra.mxu0 0.0
        %331 = vmatpush.msra.mxu0 0.0
        %332 = vmatpush.msra.mxu0 0.0
        %333 = vmatpush.msra.mxu0 0.0
        %334 = vmatpush.msra.mxu0 0.0
        %335 = vmatpush.msra.mxu0 0.0
        %336 = vmatpush.msra.mxu0 0.0
        %337 = vmatpush.msra.mxu0 0.0
        %338 = vmatpush.msra.mxu0 %v317
        %339 = vmatpush.msra.mxu0 %v316
        %340 = vmatpush.msra.mxu0 %v315
        %341 = vmatpush.msra.mxu0 %v314
        %342 = vmatmul.f32.gmra.mxu0 %v324
        %v343 = vpop.f32.mrf.mxu0
        %v344 = vadd.f32 %v320, %v343
        %345 = vdwg.mxu0
        %v346 = vmul.f32 %v344, 0.35355338
        %348 = vrot.lane.b32.xlu0 %v344, 96
        %v349 = vpop.permute.xlu0 %348
        %vm350 = vcmask 64512
        %v352 = vsel %vm350, %v346, 0
        %v354 = vsel %vm350, %v349, 0
        %356 = vmatpush.xpose.msra.mxu0 0.0
        %357 = vmatpush.xpose.msra.mxu0 0.0
        %358 = vmatpush.xpose.msra.mxu0 0.0
        %359 = vmatpush.xpose.msra.mxu0 0.0
        %360 = vmatpush.xpose.msra.mxu0 0.0
        %361 = vmatpush.xpose.msra.mxu0 0.0
        %362 = vmatpush.xpose.msra.mxu0 0.0
        %363 = vmatpush.xpose.msra.mxu0 0.0
        %364 = vmatpush.xpose.msra.mxu0 0.0
        %365 = vmatpush.xpose.msra.mxu0 0.0
        %366 = vmatpush.xpose.msra.mxu0 0.0
        %367 = vmatpush.xpose.msra.mxu0 0.0
        %368 = vmatpush.xpose.msra.mxu0 0.0
        %369 = vmatpush.xpose.msra.mxu0 0.0
        %370 = vmatpush.xpose.msra.mxu0 0.0
        %371 = vmatpush.xpose.msra.mxu0 %v354
        %372 = vmatmul.f32.gmra.mxu0 %v352
        %v373 = vpop.f32.mrf.mxu0
        %v374 = vadd.f32 0.0, %v373
        %375 = vdwg.mxu0
        %v376 = vsel %vm350, %v374, -inf
        %377 = vmax.xlane.f32.xlu0 %v376
        %v378 = vpop.xlane.xlu0 %377
        %v379 = vsub.f32 %v374, %v378
        %v380 = vmul.f32 %v379, 1.442695
        %v381 = vpow.pop %v380
        %v382 = vsel %vm350, %v381, 0.0
        %383 = vadd.xlane.f32.xlu0 %v382
        %v384 = vpop.xlane.xlu0 %383
        %v385 = vrcp.pop %v384
        %v386 = vmul.f32 %v384, %v385
        %v387 = vsub.f32 1.0, %v386
        %v388 = vmul.f32 %v385, %v387
        %v389 = vadd.f32 %v385, %v388
        %vm390 = vweird.f32 %v384
        %vm391 = vweird.f32 %v385
        %vm392 = vmor %vm390, %vm391
        %v393 = vsel %vm392, %v385, %v389
        %v394 = vand.u32 2147483647, %v384
        %vm395 = vcmp.eq.f32.partialorder %v394, 8.507059e+37
        %v396 = vand.u32 %v384, 2147483648
        %v397 = vor.u32 1.1754944e-38, %v396
        %v398 = vsel %vm395, %v397, %v393
        %v399 = vmul.f32 %v381, %v398
        %400 = vst.msk [vmem:[%s312] sm:$0xff] %vm350, %v399
        %401 = vrot.lane.b32.xlu0 %v344, 64
        %v402 = vpop.permute.xlu0 %401
        %v405 = vsel %vm350, %v399, 0
        %407 = vmatpush.msra.mxu0 0.0
        %408 = vmatpush.msra.mxu0 0.0
        %409 = vmatpush.msra.mxu0 0.0
        %410 = vmatpush.msra.mxu0 0.0
        %411 = vmatpush.msra.mxu0 0.0
        %412 = vmatpush.msra.mxu0 0.0
        %413 = vmatpush.msra.mxu0 0.0
        %414 = vmatpush.msra.mxu0 0.0
        %415 = vmatpush.msra.mxu0 0.0
        %416 = vmatpush.msra.mxu0 0.0
        %417 = vmatpush.msra.mxu0 0.0
        %418 = vmatpush.msra.mxu0 0.0
        %419 = vmatpush.msra.mxu0 0.0
        %420 = vmatpush.msra.mxu0 0.0
        %421 = vmatpush.msra.mxu0 0.0
        %422 = vmatpush.msra.mxu0 %v402
        %423 = vmatmul.f32.gmra.mxu0 %v405
        %v424 = vpop.f32.mrf.mxu0
        %v425 = vadd.f32 0.0, %v424
        %426 = vdwg.mxu0
        %427 = vrot.lane.b32.xlu0 %v346, 120
        %v428 = vpop.permute.xlu0 %427
        %429 = vrot.lane.b32.xlu0 %v344, 88
        %v430 = vpop.permute.xlu0 %429
        %v431 = vsel %vm350, %v428, 0
        %v433 = vsel %vm350, %v430, 0
        %435 = vmatpush.xpose.msra.mxu0 0.0
        %436 = vmatpush.xpose.msra.mxu0 0.0
        %437 = vmatpush.xpose.msra.mxu0 0.0
        %438 = vmatpush.xpose.msra.mxu0 0.0
        %439 = vmatpush.xpose.msra.mxu0 0.0
        %440 = vmatpush.xpose.msra.mxu0 0.0
        %441 = vmatpush.xpose.msra.mxu0 0.0
        %442 = vmatpush.xpose.msra.mxu0 0.0
        %443 = vmatpush.xpose.msra.mxu0 0.0
        %444 = vmatpush.xpose.msra.mxu0 0.0
        %445 = vmatpush.xpose.msra.mxu0 0.0
        %446 = vmatpush.xpose.msra.mxu0 0.0
        %447 = vmatpush.xpose.msra.mxu0 0.0
        %448 = vmatpush.xpose.msra.mxu0 0.0
        %449 = vmatpush.xpose.msra.mxu0 0.0
        %450 = vmatpush.xpose.msra.mxu0 %v433
        %451 = vmatmul.f32.gmra.mxu0 %v431
        %v452 = vpop.f32.mrf.mxu0
        %v453 = vadd.f32 0.0, %v452
        %454 = vdwg.mxu0
        %v455 = vsel %vm350, %v453, -inf
        %456 = vmax.xlane.f32.xlu0 %v455
        %v457 = vpop.xlane.xlu0 %456
        %v458 = vsub.f32 %v453, %v457
        %v459 = vmul.f32 %v458, 1.442695
        %v460 = vpow.pop %v459
        %v461 = vsel %vm350, %v460, 0.0
        %462 = vadd.xlane.f32.xlu0 %v461
        %v463 = vpop.xlane.xlu0 %462
        %v464 = vrcp.pop %v463
        %v465 = vmul.f32 %v463, %v464
        %v466 = vsub.f32 1.0, %v465
        %v467 = vmul.f32 %v464, %v466
        %v468 = vadd.f32 %v464, %v467
        %vm469 = vweird.f32 %v463
        %vm470 = vweird.f32 %v464
        %vm471 = vmor %vm469, %vm470
        %v472 = vsel %vm471, %v464, %v468
        %v473 = vand.u32 2147483647, %v463
        %vm474 = vcmp.eq.f32.partialorder %v473, 8.507059e+37
        %v475 = vand.u32 %v463, 2147483648
        %v476 = vor.u32 1.1754944e-38, %v475
        %v477 = vsel %vm474, %v476, %v472
        %v478 = vmul.f32 %v460, %v477
        %s479 = scalar_lea.vmem %s312, 8 [#allocation9]
        %480 = vst.msk [vmem:[%s479] sm:$0xff] %vm350, %v478
        %481 = vrot.lane.b32.xlu0 %v344, 56
        %v482 = vpop.permute.xlu0 %481
        %v485 = vsel %vm350, %v478, 0
        %487 = vmatpush.msra.mxu0 0.0
        %488 = vmatpush.msra.mxu0 0.0
        %489 = vmatpush.msra.mxu0 0.0
        %490 = vmatpush.msra.mxu0 0.0
        %491 = vmatpush.msra.mxu0 0.0
        %492 = vmatpush.msra.mxu0 0.0
        %493 = vmatpush.msra.mxu0 0.0
        %494 = vmatpush.msra.mxu0 0.0
        %495 = vmatpush.msra.mxu0 0.0
        %496 = vmatpush.msra.mxu0 0.0
        %497 = vmatpush.msra.mxu0 0.0
        %498 = vmatpush.msra.mxu0 0.0
        %499 = vmatpush.msra.mxu0 0.0
        %500 = vmatpush.msra.mxu0 0.0
        %501 = vmatpush.msra.mxu0 0.0
        %502 = vmatpush.msra.mxu0 %v482
        %503 = vmatmul.f32.gmra.mxu0 %v485
        %v504 = vpop.f32.mrf.mxu0
        %v505 = vadd.f32 0.0, %v504
        %506 = vdwg.mxu0
        %507 = vrot.lane.b32.xlu0 %v346, 112
        %v508 = vpop.permute.xlu0 %507
        %509 = vrot.lane.b32.xlu0 %v344, 80
        %v510 = vpop.permute.xlu0 %509
        %v511 = vsel %vm350, %v508, 0
        %v513 = vsel %vm350, %v510, 0
        %515 = vmatpush.xpose.msra.mxu0 0.0
        %516 = vmatpush.xpose.msra.mxu0 0.0
        %517 = vmatpush.xpose.msra.mxu0 0.0
        %518 = vmatpush.xpose.msra.mxu0 0.0
        %519 = vmatpush.xpose.msra.mxu0 0.0
        %520 = vmatpush.xpose.msra.mxu0 0.0
        %521 = vmatpush.xpose.msra.mxu0 0.0
        %522 = vmatpush.xpose.msra.mxu0 0.0
        %523 = vmatpush.xpose.msra.mxu0 0.0
        %524 = vmatpush.xpose.msra.mxu0 0.0
        %525 = vmatpush.xpose.msra.mxu0 0.0
        %526 = vmatpush.xpose.msra.mxu0 0.0
        %527 = vmatpush.xpose.msra.mxu0 0.0
        %528 = vmatpush.xpose.msra.mxu0 0.0
        %529 = vmatpush.xpose.msra.mxu0 0.0
        %530 = vmatpush.xpose.msra.mxu0 %v513
        %531 = vmatmul.f32.gmra.mxu0 %v511
        %v532 = vpop.f32.mrf.mxu0
        %v533 = vadd.f32 0.0, %v532
        %534 = vdwg.mxu0
        %v535 = vsel %vm350, %v533, -inf
        %536 = vmax.xlane.f32.xlu0 %v535
        %v537 = vpop.xlane.xlu0 %536
        %v538 = vsub.f32 %v533, %v537
        %v539 = vmul.f32 %v538, 1.442695
        %v540 = vpow.pop %v539
        %v541 = vsel %vm350, %v540, 0.0
        %542 = vadd.xlane.f32.xlu0 %v541
        %v543 = vpop.xlane.xlu0 %542
        %v544 = vrcp.pop %v543
        %v545 = vmul.f32 %v543, %v544
        %v546 = vsub.f32 1.0, %v545
        %v547 = vmul.f32 %v544, %v546
        %v548 = vadd.f32 %v544, %v547
        %vm549 = vweird.f32 %v543
        %vm550 = vweird.f32 %v544
        %vm551 = vmor %vm549, %vm550
        %v552 = vsel %vm551, %v544, %v548
        %v553 = vand.u32 2147483647, %v543
        %vm554 = vcmp.eq.f32.partialorder %v553, 8.507059e+37
        %v555 = vand.u32 %v543, 2147483648
        %v556 = vor.u32 1.1754944e-38, %v555
        %v557 = vsel %vm554, %v556, %v552
        %v558 = vmul.f32 %v540, %v557
        %s559 = scalar_lea.vmem %s312, 16 [#allocation9]
        %560 = vst.msk [vmem:[%s559] sm:$0xff] %vm350, %v558
        %561 = vrot.lane.b32.xlu0 %v344, 48
        %v562 = vpop.permute.xlu0 %561
        %v565 = vsel %vm350, %v558, 0
        %567 = vmatpush.msra.mxu0 0.0
        %568 = vmatpush.msra.mxu0 0.0
        %569 = vmatpush.msra.mxu0 0.0
        %570 = vmatpush.msra.mxu0 0.0
        %571 = vmatpush.msra.mxu0 0.0
        %572 = vmatpush.msra.mxu0 0.0
        %573 = vmatpush.msra.mxu0 0.0
        %574 = vmatpush.msra.mxu0 0.0
        %575 = vmatpush.msra.mxu0 0.0
        %576 = vmatpush.msra.mxu0 0.0
        %577 = vmatpush.msra.mxu0 0.0
        %578 = vmatpush.msra.mxu0 0.0
        %579 = vmatpush.msra.mxu0 0.0
        %580 = vmatpush.msra.mxu0 0.0
        %581 = vmatpush.msra.mxu0 0.0
        %582 = vmatpush.msra.mxu0 %v562
        %583 = vmatmul.f32.gmra.mxu0 %v565
        %v584 = vpop.f32.mrf.mxu0
        %v585 = vadd.f32 0.0, %v584
        %586 = vdwg.mxu0
        %587 = vrot.lane.b32.xlu0 %v346, 104
        %v588 = vpop.permute.xlu0 %587
        %589 = vrot.lane.b32.xlu0 %v344, 72
        %v590 = vpop.permute.xlu0 %589
        %v591 = vsel %vm350, %v588, 0
        %v593 = vsel %vm350, %v590, 0
        %595 = vmatpush.xpose.msra.mxu0 0.0
        %596 = vmatpush.xpose.msra.mxu0 0.0
        %597 = vmatpush.xpose.msra.mxu0 0.0
        %598 = vmatpush.xpose.msra.mxu0 0.0
        %599 = vmatpush.xpose.msra.mxu0 0.0
        %600 = vmatpush.xpose.msra.mxu0 0.0
        %601 = vmatpush.xpose.msra.mxu0 0.0
        %602 = vmatpush.xpose.msra.mxu0 0.0
        %603 = vmatpush.xpose.msra.mxu0 0.0
        %604 = vmatpush.xpose.msra.mxu0 0.0
        %605 = vmatpush.xpose.msra.mxu0 0.0
        %606 = vmatpush.xpose.msra.mxu0 0.0
        %607 = vmatpush.xpose.msra.mxu0 0.0
        %608 = vmatpush.xpose.msra.mxu0 0.0
        %609 = vmatpush.xpose.msra.mxu0 0.0
        %610 = vmatpush.xpose.msra.mxu0 %v593
        %611 = vmatmul.f32.gmra.mxu0 %v591
        %v612 = vpop.f32.mrf.mxu0
        %v613 = vadd.f32 0.0, %v612
        %614 = vdwg.mxu0
        %v615 = vsel %vm350, %v613, -inf
        %616 = vmax.xlane.f32.xlu0 %v615
        %v617 = vpop.xlane.xlu0 %616
        %v618 = vsub.f32 %v613, %v617
        %v619 = vmul.f32 %v618, 1.442695
        %v620 = vpow.pop %v619
        %v621 = vsel %vm350, %v620, 0.0
        %622 = vadd.xlane.f32.xlu0 %v621
        %v623 = vpop.xlane.xlu0 %622
        %v624 = vrcp.pop %v623
        %v625 = vmul.f32 %v623, %v624
        %v626 = vsub.f32 1.0, %v625
        %v627 = vmul.f32 %v624, %v626
        %v628 = vadd.f32 %v624, %v627
        %vm629 = vweird.f32 %v623
        %vm630 = vweird.f32 %v624
        %vm631 = vmor %vm629, %vm630
        %v632 = vsel %vm631, %v624, %v628
        %v633 = vand.u32 2147483647, %v623
        %vm634 = vcmp.eq.f32.partialorder %v633, 8.507059e+37
        %v635 = vand.u32 %v623, 2147483648
        %v636 = vor.u32 1.1754944e-38, %v635
        %v637 = vsel %vm634, %v636, %v632
        %v638 = vmul.f32 %v620, %v637
        %s639 = scalar_lea.vmem %s312, 24 [#allocation9]
        %640 = vst.msk [vmem:[%s639] sm:$0xff] %vm350, %v638
        %641 = vrot.lane.b32.xlu0 %v344, 40
        %v642 = vpop.permute.xlu0 %641
        %v645 = vsel %vm350, %v638, 0
        %647 = vmatpush.msra.mxu0 0.0
        %648 = vmatpush.msra.mxu0 0.0
        %649 = vmatpush.msra.mxu0 0.0
        %650 = vmatpush.msra.mxu0 0.0
        %651 = vmatpush.msra.mxu0 0.0
        %652 = vmatpush.msra.mxu0 0.0
        %653 = vmatpush.msra.mxu0 0.0
        %654 = vmatpush.msra.mxu0 0.0
        %655 = vmatpush.msra.mxu0 0.0
        %656 = vmatpush.msra.mxu0 0.0
        %657 = vmatpush.msra.mxu0 0.0
        %658 = vmatpush.msra.mxu0 0.0
        %659 = vmatpush.msra.mxu0 0.0
        %660 = vmatpush.msra.mxu0 0.0
        %661 = vmatpush.msra.mxu0 0.0
        %662 = vmatpush.msra.mxu0 %v642
        %663 = vmatmul.f32.gmra.mxu0 %v645
        %v664 = vpop.f32.mrf.mxu0
        %v665 = vadd.f32 0.0, %v664
        %666 = vdwg.mxu0
        %668 = vrot.lane.b32.xlu0 %v505, 8
        %v669 = vpop.permute.xlu0 %668
        %672 = vrot.lane.b32.xlu0 %v585, 16
        %v673 = vpop.permute.xlu0 %672
        %676 = vrot.lane.b32.xlu0 %v665, 24
        %v677 = vpop.permute.xlu0 %676
        %v679 = vsel %vm350, %v425, %v669
        %vm680 = vcmask 130048
        %v681 = vsel %vm680, %v679, %v673
        %vm682 = vcmask 195584
        %v683 = vsel %vm682, %v681, %v677
        %v684 = vld [vmem:[#allocation7] sm:$0xff]
        %v685 = vld [vmem:[#allocation7 + $0x8] sm:$0xff]
        %v686 = vld [vmem:[#allocation7 + $0x10] sm:$0xff]
        %v687 = vld [vmem:[#allocation7 + $0x18] sm:$0xff]
        %v688 = vld [vmem:[%s4] sm:$0x1]
        %v690 = vperm.slane %v688, 0
        %v693 = vsel %vm322, %v683, 0
        %695 = vmatpush.msra.mxu0 0.0
        %696 = vmatpush.msra.mxu0 0.0
        %697 = vmatpush.msra.mxu0 0.0
        %698 = vmatpush.msra.mxu0 0.0
        %699 = vmatpush.msra.mxu0 0.0
        %700 = vmatpush.msra.mxu0 0.0
        %701 = vmatpush.msra.mxu0 0.0
        %702 = vmatpush.msra.mxu0 0.0
        %703 = vmatpush.msra.mxu0 0.0
        %704 = vmatpush.msra.mxu0 0.0
        %705 = vmatpush.msra.mxu0 0.0
        %706 = vmatpush.msra.mxu0 0.0
        %707 = vmatpush.msra.mxu0 %v687
        %708 = vmatpush.msra.mxu0 %v686
        %709 = vmatpush.msra.mxu0 %v685
        %710 = vmatpush.msra.mxu0 %v684
        %711 = vmatmul.f32.gmra.mxu0 %v693
        %v712 = vpop.f32.mrf.mxu0
        %v713 = vadd.f32 %v690, %v712
        %714 = vdwg.mxu0
        %715 = vst.msk [vmem:[%s305] sm:$0xff] %vm322, %v713
        %s716 = sand.u32 %s146, 1
        %s717 = scalar_lea.sflag [#allocation4], %s716
        %s718 = sand.u32 %s146, 1
        %s719 = smul.addr %s718, 8
        %s720 = scalar_lea.vmem [#allocation8], %s719
        %s721 = sand.u32 %s172, 1
        %s722 = scalar_lea.sflag [#allocation10], %s721
        %s723 = sand.u32 %s172, 1
        %s724 = smul.addr %s723, 32
        %s725 = scalar_lea.vmem [#allocation9], %s724
        // Predicated region
        $region53: #{tpu_custom_call.1} parent=39 // pred_check
          %p726 = pneg %p156
        $region54: #{tpu_custom_call.1} parent=39 // pred_check_branch
          %728 = sbr.rel (%p726) target = $region56
        $region55: #{tpu_custom_call.1} parent=39 // pred_region
          %730 = vsyncadd %s717, 0
          %s731 = smul.addr %s28, 8
          %s732 = scalar_lea.hbm %s5, %s731
          %s734 = sshll.u32 %s720, 4
          %s735 = int_to_ptr.vmem [resolvable:$true] %s734
          %s736 = sshll.u32 %s732, 4
          %s737 = int_to_ptr.hbm [resolvable:$true] %s736
          %739 = dma.vmem_to_hbm [thread:$0]  %s735, 128, %s737, %s717
        $region56: #{tpu_custom_call.1} parent=39 // pred_fallthru
          _
        // Predicated region
        $region57: #{tpu_custom_call.1} parent=39 // pred_check
          %p740 = pneg %p182
        $region58: #{tpu_custom_call.1} parent=39 // pred_check_branch
          %742 = sbr.rel (%p740) target = $region60
        $region59: #{tpu_custom_call.1} parent=39 // pred_region
          %744 = vsyncadd %s722, 0
          %s745 = smul.addr %s28, 4
          %s746 = smul.addr %s745, 8
          %s747 = scalar_lea.hbm %s6, %s746
          %s748 = sshll.u32 %s725, 4
          %s749 = int_to_ptr.vmem [resolvable:$true] %s748
          %s750 = sshll.u32 %s747, 4
          %s751 = int_to_ptr.hbm [resolvable:$true] %s750
          %756 = dma.vmem_to_hbm [thread:$0]  %s749, 512, %s751, %s722, 128, 128, 8
        $region60: #{tpu_custom_call.1} parent=39 // pred_fallthru
          _
      $region40: #{tpu_custom_call.1} parent=5 // pred_fallthru
        _
      %p757 = scmp.le.s32.totalorder 2, %s23
      // Predicated region
      $region61: #{tpu_custom_call.1} parent=5 // pred_check
        %p758 = pneg %p757
      $region62: #{tpu_custom_call.1} parent=5 // pred_check_branch
        %760 = sbr.rel (%p758) target = $region64
      $region63: #{tpu_custom_call.1} parent=5 // pred_region
        %s761 = ssub.s32 %s23, 2
        // Predicated region
        $region65: #{tpu_custom_call.1} parent=63 // pred_check
          %p762 = pneg %p162
        $region66: #{tpu_custom_call.1} parent=63 // pred_check_branch
          %764 = sbr.rel (%p762) target = $region68
        $region67: #{tpu_custom_call.1} parent=63 // pred_region
          %s765 = sand.u32 %s147, 1
          %s766 = scalar_lea.sflag [#allocation4], %s765
          %s767 = sand.u32 %s147, 1
          %s768 = smul.addr %s767, 8
          %s769 = scalar_lea.vmem [#allocation8], %s768
          %771 = dma.done %s766, 128
        $region68: #{tpu_custom_call.1} parent=63 // pred_fallthru
          _
        // Predicated region
        $region69: #{tpu_custom_call.1} parent=63 // pred_check
          %p772 = pneg %p188
        $region70: #{tpu_custom_call.1} parent=63 // pred_check_branch
          %774 = sbr.rel (%p772) target = $region72
        $region71: #{tpu_custom_call.1} parent=63 // pred_region
          %s775 = sand.u32 %s173, 1
          %s776 = scalar_lea.sflag [#allocation10], %s775
          %s777 = sand.u32 %s173, 1
          %s778 = smul.addr %s777, 32
          %s779 = scalar_lea.vmem [#allocation9], %s778
          %781 = dma.done %s776, 512
        $region72: #{tpu_custom_call.1} parent=63 // pred_fallthru
          _
      $region64: #{tpu_custom_call.1} parent=5 // pred_fallthru
        _
    $region6: #{tpu_custom_call.1} parent=1 // loop_footer
      %s27 = sadd.s32 1, %s23
    $region7: #{tpu_custom_call.1} parent=1 // loop_footer_branch
      %22 = sbr.rel target = $region3
    $region8: #{tpu_custom_call.1} parent=1 // loop_exit
      _
    %782 = vsyncpa [#allocation3], 1
    %s783 = scalar_lea.sflag [#allocation3], 1
    %784 = vsyncpa %s783, 1
    %785 = vsyncpa [#allocation6], 1
    %786 = vsyncpa [#allocation4], 1
    %s787 = scalar_lea.sflag [#allocation4], 1
    %788 = vsyncpa %s787, 1
    %789 = vsyncpa [#allocation10], 1
    %s790 = scalar_lea.sflag [#allocation10], 1
    %791 = vsyncpa %s790, 1

</llo_original>
